<compile_context>
chip_gen: v7x
topology: tpu7x:2x2x1
jax: 0.10.0
libtpu: 0.0.40
codegen_flags: <defaults>
</compile_context>

<pallas_src>
import functools

import jax
import jax.numpy as jnp
import numpy as np
from jax.experimental import pallas as pl
from jax.experimental.pallas import tpu as pltpu

_NEG_FILL = -1e30                 # logit fill for padded class lanes
_VMEM_BUDGET = 48 * 1024 * 1024   # > 32 MiB scoped default, < v7x 64 MiB/TC


def perceptron_crf_kernel(x_ref, w1_ref, b1_ref, w2_ref, b2_ref, f_ref, mu_ref,
                          out_ref, *, n_classes):
    # 2-layer perceptron: both contractions on the MXU with f32 accumulation.
    h1 = jnp.maximum(
        jnp.dot(x_ref[...], w1_ref[...], preferred_element_type=jnp.float32)
        + b1_ref[...], 0.0)                                            # [TN, H]
    y = (jnp.dot(h1, w2_ref[...], preferred_element_type=jnp.float32)
         + b2_ref[...])                                                # [TN, Cp]

    # Single CRF update.  y never changes inside the torch loop, so softmax(y),
    # h2 and the compatibility transform are loop-invariant: any n_iter >= 1 is
    # exactly the one-step result  h = y - comp  (review #2).
    m = jnp.max(y, axis=1, keepdims=True)
    e = jnp.exp(y - m)                     # padded lanes: exp(-1e30 - m) == 0
    s = jnp.sum(e, axis=1, keepdims=True)  # softmax denom (real lanes only)

    # Message passing restricted to the C real class columns (f streamed
    # unpadded):  h2 = softmax(y) * f_comb.
    h2 = (e[:, 0:n_classes] / s) * f_ref[...]                          # [TN, C]

    # Compatibility transform h2 @ mu on the MXU (mu zero-padded to Cp lanes,
    # so padded output lanes stay untouched).
    comp = jnp.dot(h2, mu_ref[...], preferred_element_type=jnp.float32)  # [TN, Cp]

    out_ref[...] = y - comp               # lane-dense [TN, Cp] store


def _default_block_n(n, f_dim, h_dim, c, cp, vmem_budget):
    """Largest sublane-aligned row tile that fits ~half the VMEM budget."""
    n_up = ((n + 7) // 8) * 8
    resident = 2 * 4 * (f_dim * h_dim + h_dim + h_dim * cp + cp + c * cp)
    per_row = 4 * (2 * (f_dim + c + cp)      # double-buffered x / f_comb / out tiles
                   + 6 * cp + 2 * h_dim)     # in-kernel f32 temporaries
    avail = max(vmem_budget // 2 - resident, 8 * per_row)
    bn = max(8, min(512, (avail // per_row) // 8 * 8))
    bn = min(bn, n_up)
    # >= 2 grid steps when there is enough work, so v7x megacore can split rows.
    if n_up >= 128:
        bn = min(bn, pl.cdiv(n_up // 2, 8) * 8)
    return bn


def perceptron_crf_forward(x, w1, b1, w2, b2, smooth_w, f, mu, *, n_iter=3,
                           block_n=None, lane_pad=128,
                           vmem_budget=_VMEM_BUDGET):
    """x:[N,F], w1:[F,H], b1:[1,H], w2:[H,C], b2:[1,C], smooth_w:[1,K],
    f:[K,N,C] (elementwise filter responses), mu:[C,C] -> logits [N,C]."""
    N, F = x.shape
    H = w1.shape[1]
    C = w2.shape[1]
    K = f.shape[0]

    if n_iter == 0:                      # torch returns the zeros_like(y) init
        return jnp.zeros((N, C), jnp.float32)

    # Pad the class axis of the tiny resident operands to a lane-dense width.
    Cp = lane_pad * pl.cdiv(C, lane_pad)
    w2_p = jnp.zeros((H, Cp), jnp.float32).at[:, :C].set(w2.astype(jnp.float32))
    b2_p = jnp.full((1, Cp), _NEG_FILL, jnp.float32).at[:, :C].set(
        b2.reshape(1, C).astype(jnp.float32))
    mu_p = jnp.zeros((C, Cp), jnp.float32).at[:, :C].set(mu.astype(jnp.float32))

    # Fold the K affinity maps once in the wrapper (review #1): the streamed f
    # operand shrinks from [K, N, Cp] to an unpadded [N, C] tile.
    f_comb = jnp.einsum('k,knc->nc',
                        smooth_w.reshape(K).astype(jnp.float32),
                        f.astype(jnp.float32))                       # [N, C]

    # Row tiling (review #4/#5/#9): largest VMEM-fitting sublane-aligned tile;
    # N is zero-padded up to a tile multiple so awkward N can't force a single
    # oversized tile; padded rows are sliced off at the end.
    if block_n is None:
        block_n = _default_block_n(N, F, H, C, Cp, vmem_budget)
    block_n = max(8, ((int(block_n) + 7) // 8) * 8)
    N_pad = pl.cdiv(N, block_n) * block_n
    x_in = x.astype(jnp.float32)
    if N_pad != N:
        x_in = jnp.zeros((N_pad, F), jnp.float32).at[:N].set(x_in)
        f_comb = jnp.zeros((N_pad, C), jnp.float32).at[:N].set(f_comb)
    grid = (N_pad // block_n,)

    kernel = functools.partial(perceptron_crf_kernel, n_classes=C)

    cost = pl.CostEstimate(
        flops=int(2 * N_pad * F * H + N_pad * H + 2 * N_pad * H * Cp
                  + 2 * K * N * C + 5 * N_pad * Cp + 3 * N_pad * C
                  + 2 * N_pad * C * Cp),
        transcendentals=int(N_pad * Cp),
        bytes_accessed=int(4 * (x_in.size + w1.size + b1.size + w2_p.size
                                + b2_p.size + f_comb.size + mu_p.size
                                + N_pad * Cp)),
    )

    out_padded = pl.pallas_call(
        kernel,
        out_shape=jax.ShapeDtypeStruct((N_pad, Cp), jnp.float32),
        grid=grid,
        in_specs=[
            pl.BlockSpec((block_n, F), lambda i: (i, 0)),   # X row tile
            # Grid-invariant resident operands (constant index_map).
            # pl.Buffered(1) would save only a few KiB here; skipped.
            pl.BlockSpec((F, H), lambda i: (0, 0)),         # layer1 weight
            pl.BlockSpec((1, H), lambda i: (0, 0)),         # layer1 bias
            pl.BlockSpec((H, Cp), lambda i: (0, 0)),        # layer2 weight (pad)
            pl.BlockSpec((1, Cp), lambda i: (0, 0)),        # layer2 bias  (pad)
            pl.BlockSpec((block_n, C), lambda i: (i, 0)),   # folded f tile (unpadded)
            pl.BlockSpec((C, Cp), lambda i: (0, 0)),        # mu (pad)
        ],
        out_specs=pl.BlockSpec((block_n, Cp), lambda i: (i, 0)),
        compiler_params=pltpu.CompilerParams(
            dimension_semantics=("parallel",),
            vmem_limit_bytes=int(vmem_budget),
        ),
        cost_estimate=cost,
    )(x_in, w1.astype(jnp.float32), b1.reshape(1, H).astype(jnp.float32),
      w2_p, b2_p, f_comb, mu_p)

    return out_padded[:N, :C]


def reference_forward(x, w1, b1, w2, b2, smooth_w, f, mu, *, n_iter=3):
    y = jnp.maximum(x @ w1 + b1, 0.0) @ w2 + b2
    h = jnp.zeros_like(y)
    for _ in range(n_iter):
        h = jax.nn.softmax(y, axis=1)
        h2 = jnp.zeros_like(h)
        for k in range(f.shape[0]):
            h2 = h2 + h * f[k] * smooth_w[0, k]
        h = y - h2 @ mu          # (mu @ h2.T).T == h2 @ mu for symmetric mu
    return h


if __name__ == "__main__":
    # n_features=32, n_hidden=32, n_classes=2, n_kernels=2, n_iter=3, 64 samples.
    N, F, H, C, K, N_ITER = 64, 32, 32, 2, 2, 3

    key = jax.random.PRNGKey(0)
    kx, k1, kb1, k2, kb2, kw, kf = jax.random.split(key, 7)

    x = jax.random.normal(kx, (N, F), dtype=jnp.float32)

    w1 = jax.random.normal(k1, (F, H), dtype=jnp.float32) * 0.1    # layer1 weight^T
    b1 = jax.random.normal(kb1, (1, H), dtype=jnp.float32) * 0.1
    w2 = jax.random.normal(k2, (H, C), dtype=jnp.float32) * 0.1    # layer2 weight^T
    b2 = jax.random.normal(kb2, (1, C), dtype=jnp.float32) * 0.1

    smooth_w = jax.random.normal(kw, (1, K), dtype=jnp.float32)    # self.w ~ randn(K)

    # data.f: per-kernel, per-sample, per-class non-negative filter responses
    # (elementwise-broadcastable with h in `h * f * w[k]`).
    f = jax.nn.relu(jax.random.normal(kf, (K, N, C), dtype=jnp.float32))

    mu = (jnp.ones((C, C)) - jnp.eye(C)).astype(jnp.float32)       # fixed buffer

    out = perceptron_crf_forward(x, w1, b1, w2, b2, smooth_w, f, mu,
                                 n_iter=N_ITER)   # default tile: 64 rows, grid=(1,)
    out = jax.block_until_ready(out)

    ref = reference_forward(x, w1, b1, w2, b2, smooth_w, f, mu, n_iter=N_ITER)
    np.testing.assert_allclose(np.asarray(out), np.asarray(ref),
                               rtol=1e-5, atol=1e-5)

    print("KERNEL_OK")
</pallas_src>

<mosaic_0001>
module attributes {stable_mosaic.version = 11 : i64} {
  func.func @perceptron_crf_kernel(%arg0: i32, %arg1: memref<64x32xf32, #tpu.memory_space<vmem>>, %arg2: memref<32x32xf32, #tpu.memory_space<vmem>>, %arg3: memref<1x32xf32, #tpu.memory_space<vmem>>, %arg4: memref<32x128xf32, #tpu.memory_space<vmem>>, %arg5: memref<1x128xf32, #tpu.memory_space<vmem>>, %arg6: memref<64x2xf32, #tpu.memory_space<vmem>>, %arg7: memref<2x128xf32, #tpu.memory_space<vmem>>, %arg8: memref<64x128xf32, #tpu.memory_space<vmem>>) attributes {dimension_semantics = [#tpu.dimension_semantics<parallel>], iteration_bounds = array<i64: 1>, scalar_prefetch = 0 : i64, scratch_operands = 0 : i64, tpu.core_type = #tpu.core_type<tc>, window_params = [{transform_indices = @transform_0, window_bounds = array<i64: 64, 32>}, {pipeline_mode = #tpu.pipeline_mode<synchronous>, transform_indices = @transform_1, window_bounds = array<i64: 32, 32>}, {pipeline_mode = #tpu.pipeline_mode<synchronous>, transform_indices = @transform_2, window_bounds = array<i64: 1, 32>}, {pipeline_mode = #tpu.pipeline_mode<synchronous>, transform_indices = @transform_3, window_bounds = array<i64: 32, 128>}, {pipeline_mode = #tpu.pipeline_mode<synchronous>, transform_indices = @transform_4, window_bounds = array<i64: 1, 128>}, {transform_indices = @transform_5, window_bounds = array<i64: 64, 2>}, {pipeline_mode = #tpu.pipeline_mode<synchronous>, transform_indices = @transform_6, window_bounds = array<i64: 2, 128>}, {transform_indices = @transform_7, window_bounds = array<i64: 64, 128>}]} {
    %c0 = arith.constant 0 : index
    %c0_0 = arith.constant 0 : index
    %0 = vector.load %arg1[%c0, %c0_0] : memref<64x32xf32, #tpu.memory_space<vmem>>, vector<64x32xf32>
    %c0_1 = arith.constant 0 : index
    %c0_2 = arith.constant 0 : index
    %1 = vector.load %arg2[%c0_1, %c0_2] : memref<32x32xf32, #tpu.memory_space<vmem>>, vector<32x32xf32>
    %cst = arith.constant dense<0.000000e+00> : vector<64x32xf32>
    %2 = tpu.matmul %0, %1, %cst {dimension_numbers = #tpu.dot_dimension_numbers<[1], [0], [0], [1], [0, 0, 1, 1], [], []>} : vector<64x32xf32>, vector<32x32xf32>, vector<64x32xf32> -> vector<64x32xf32>
    %c0_3 = arith.constant 0 : index
    %c0_4 = arith.constant 0 : index
    %3 = vector.load %arg3[%c0_3, %c0_4] : memref<1x32xf32, #tpu.memory_space<vmem>>, vector<1x32xf32>
    %4 = vector.broadcast %3 : vector<1x32xf32> to vector<64x32xf32>
    %5 = arith.addf %2, %4 : vector<64x32xf32>
    %cst_5 = arith.constant 0.000000e+00 : f32
    %6 = vector.broadcast %cst_5 : f32 to vector<64x32xf32>
    %7 = arith.maximumf %5, %6 : vector<64x32xf32>
    %c0_6 = arith.constant 0 : index
    %c0_7 = arith.constant 0 : index
    %8 = vector.load %arg4[%c0_6, %c0_7] : memref<32x128xf32, #tpu.memory_space<vmem>>, vector<32x128xf32>
    %cst_8 = arith.constant dense<0.000000e+00> : vector<64x128xf32>
    %9 = tpu.matmul %7, %8, %cst_8 {dimension_numbers = #tpu.dot_dimension_numbers<[1], [0], [0], [1], [0, 0, 1, 1], [], []>} : vector<64x32xf32>, vector<32x128xf32>, vector<64x128xf32> -> vector<64x128xf32>
    %c0_9 = arith.constant 0 : index
    %c0_10 = arith.constant 0 : index
    %10 = vector.load %arg5[%c0_9, %c0_10] : memref<1x128xf32, #tpu.memory_space<vmem>>, vector<1x128xf32>
    %11 = vector.broadcast %10 : vector<1x128xf32> to vector<64x128xf32>
    %12 = arith.addf %9, %11 : vector<64x128xf32>
    %cst_11 = arith.constant dense<0xFF800000> : vector<64xf32>
    %13 = vector.multi_reduction <maximumf>, %12, %cst_11 [1] : vector<64x128xf32> to vector<64xf32>
    %14 = vector.shape_cast %13 : vector<64xf32> to vector<64x1xf32>
    %15 = vector.broadcast %14 : vector<64x1xf32> to vector<64x128xf32>
    %16 = arith.subf %12, %15 : vector<64x128xf32>
    %17 = math.exp %16 : vector<64x128xf32>
    %cst_12 = arith.constant dense<0.000000e+00> : vector<64xf32>
    %18 = vector.multi_reduction <add>, %17, %cst_12 [1] : vector<64x128xf32> to vector<64xf32>
    %19 = vector.shape_cast %18 : vector<64xf32> to vector<64x1xf32>
    %20 = vector.extract_strided_slice %17 {offsets = [0, 0], sizes = [64, 2], strides = [1, 1]} : vector<64x128xf32> to vector<64x2xf32>
    %21 = vector.broadcast %19 : vector<64x1xf32> to vector<64x2xf32>
    %22 = arith.divf %20, %21 : vector<64x2xf32>
    %c0_13 = arith.constant 0 : index
    %c0_14 = arith.constant 0 : index
    %23 = vector.load %arg6[%c0_13, %c0_14] : memref<64x2xf32, #tpu.memory_space<vmem>>, vector<64x2xf32>
    %24 = arith.mulf %22, %23 : vector<64x2xf32>
    %c0_15 = arith.constant 0 : index
    %c0_16 = arith.constant 0 : index
    %25 = vector.load %arg7[%c0_15, %c0_16] : memref<2x128xf32, #tpu.memory_space<vmem>>, vector<2x128xf32>
    %cst_17 = arith.constant dense<0.000000e+00> : vector<64x128xf32>
    %26 = tpu.matmul %24, %25, %cst_17 {dimension_numbers = #tpu.dot_dimension_numbers<[1], [0], [0], [1], [0, 0, 1, 1], [], []>} : vector<64x2xf32>, vector<2x128xf32>, vector<64x128xf32> -> vector<64x128xf32>
    %27 = arith.subf %12, %26 : vector<64x128xf32>
    %c0_18 = arith.constant 0 : index
    %c0_19 = arith.constant 0 : index
    %28 = vector.load %arg8[%c0_18, %c0_19] : memref<64x128xf32, #tpu.memory_space<vmem>>, vector<64x128xf32>
    tpu.vector_store %arg8[%c0_18, %c0_19], %27 {strides = array<i32>} : memref<64x128xf32, #tpu.memory_space<vmem>>, vector<64x128xf32>,
    return
  }
  func.func @transform_0(%arg0: i32) -> (i32, i32) {
    %c0_i32 = arith.constant 0 : i32
    %c0_i32_0 = arith.constant 0 : i32
    return %arg0, %c0_i32 : i32, i32
  }
  func.func @transform_1(%arg0: i32) -> (i32, i32) {
    %c0_i32 = arith.constant 0 : i32
    %c0_i32_0 = arith.constant 0 : i32
    %c0_i32_1 = arith.constant 0 : i32
    return %c0_i32, %c0_i32_0 : i32, i32
  }
  func.func @transform_2(%arg0: i32) -> (i32, i32) {
    %c0_i32 = arith.constant 0 : i32
    %c0_i32_0 = arith.constant 0 : i32
    %c0_i32_1 = arith.constant 0 : i32
    return %c0_i32, %c0_i32_0 : i32, i32
  }
  func.func @transform_3(%arg0: i32) -> (i32, i32) {
    %c0_i32 = arith.constant 0 : i32
    %c0_i32_0 = arith.constant 0 : i32
    %c0_i32_1 = arith.constant 0 : i32
    return %c0_i32, %c0_i32_0 : i32, i32
  }
  func.func @transform_4(%arg0: i32) -> (i32, i32) {
    %c0_i32 = arith.constant 0 : i32
    %c0_i32_0 = arith.constant 0 : i32
    %c0_i32_1 = arith.constant 0 : i32
    return %c0_i32, %c0_i32_0 : i32, i32
  }
  func.func @transform_5(%arg0: i32) -> (i32, i32) {
    %c0_i32 = arith.constant 0 : i32
    %c0_i32_0 = arith.constant 0 : i32
    return %arg0, %c0_i32 : i32, i32
  }
  func.func @transform_6(%arg0: i32) -> (i32, i32) {
    %c0_i32 = arith.constant 0 : i32
    %c0_i32_0 = arith.constant 0 : i32
    %c0_i32_1 = arith.constant 0 : i32
    return %c0_i32, %c0_i32_0 : i32, i32
  }
  func.func @transform_7(%arg0: i32) -> (i32, i32) {
    %c0_i32 = arith.constant 0 : i32
    %c0_i32_0 = arith.constant 0 : i32
    return %arg0, %c0_i32 : i32, i32
  }
}

</mosaic_0001>

<llo_original>
// kernel: tpu_custom_call.1
$region0: #{tpu_custom_call.1}
  #allocation0 [shape = 'u32[]', space=smem, size = 0x4, offset = 0x4, fixed_abs, tag = 'smem constant byte address 0x4 - core index']
  #allocation1 [shape = 'u32[144,128]{1,0:T(1,128)}', space=vmem, size = 0x12000, scoped, tag = 'internal scratch']
  %s0 = inlined_call_operand.vmem [shape: f32[64,32], index: 0, kind: input, shape index: {}]
  %s1 = inlined_call_operand.vmem [shape: f32[32,32], index: 1, kind: input, shape index: {}]
  %s2 = inlined_call_operand.vmem [shape: f32[1,32], index: 2, kind: input, shape index: {}]
  %s3 = inlined_call_operand.vmem [shape: f32[32,128], index: 3, kind: input, shape index: {}]
  %s4 = inlined_call_operand.vmem [shape: f32[1,128], index: 4, kind: input, shape index: {}]
  %s5 = inlined_call_operand.vmem [shape: f32[64,2], index: 5, kind: input, shape index: {}]
  %s6 = inlined_call_operand.vmem [shape: f32[2,128], index: 6, kind: input, shape index: {}]
  %s7 = inlined_call_operand.hbm [shape: f32[64,128], index: 7, kind: output, shape index: {}]
  %s8 = sld [smem:[#allocation0]]
  $region38: #{tpu_custom_call.1} parent=0
    _
  %s10 = ssub.s32 1, %s8
  %s11 = scalar_select 0, %s10, %s8
  $region1: #{tpu_custom_call.1} parent=0
    #allocation2 [shape = 'u8[32768]{0}', space=vmem, size = 0x8000, scoped, tag = 'output window, operand 0, single buffered']
    #allocation3 [shape = 's32[1]{0}', space=sflag, size = 0x4, scoped, tag = 'scoped memory for tpu_custom_call.1']
    %12 = vsyncpa [#allocation3], 0
    // Predicated region
    $region2: #{tpu_custom_call.1} parent=1 // pred_check
      _
    $region3: #{tpu_custom_call.1} parent=1 // pred_check_branch
      %14 = sbr.rel (0) target = $region5
    $region4: #{tpu_custom_call.1} parent=1 // pred_region
      _
    $region5: #{tpu_custom_call.1} parent=1 // pred_fallthru
      _
    // Predicated region
    $region6: #{tpu_custom_call.1} parent=1 // pred_check
      _
    $region7: #{tpu_custom_call.1} parent=1 // pred_check_branch
      %16 = sbr.rel (0) target = $region9
    $region8: #{tpu_custom_call.1} parent=1 // pred_region
      _
    $region9: #{tpu_custom_call.1} parent=1 // pred_fallthru
      _
    // Predicated region
    $region10: #{tpu_custom_call.1} parent=1 // pred_check
      _
    $region11: #{tpu_custom_call.1} parent=1 // pred_check_branch
      %18 = sbr.rel (0) target = $region13
    $region12: #{tpu_custom_call.1} parent=1 // pred_region
      _
    $region13: #{tpu_custom_call.1} parent=1 // pred_fallthru
      _
    // Predicated region
    $region14: #{tpu_custom_call.1} parent=1 // pred_check
      _
    $region15: #{tpu_custom_call.1} parent=1 // pred_check_branch
      %20 = sbr.rel (0) target = $region17
    $region16: #{tpu_custom_call.1} parent=1 // pred_region
      _
    $region17: #{tpu_custom_call.1} parent=1 // pred_fallthru
      _
    // Predicated region
    $region18: #{tpu_custom_call.1} parent=1 // pred_check
      _
    $region19: #{tpu_custom_call.1} parent=1 // pred_check_branch
      %22 = sbr.rel (0) target = $region21
    $region20: #{tpu_custom_call.1} parent=1 // pred_region
      _
    $region21: #{tpu_custom_call.1} parent=1 // pred_fallthru
      _
    // Predicated region
    $region22: #{tpu_custom_call.1} parent=1 // pred_check
      _
    $region23: #{tpu_custom_call.1} parent=1 // pred_check_branch
      %24 = sbr.rel (0) target = $region25
    $region24: #{tpu_custom_call.1} parent=1 // pred_region
      _
    $region25: #{tpu_custom_call.1} parent=1 // pred_fallthru
      _
    // Predicated region
    $region26: #{tpu_custom_call.1} parent=1 // pred_check
      _
    $region27: #{tpu_custom_call.1} parent=1 // pred_check_branch
      %26 = sbr.rel (0) target = $region29
    $region28: #{tpu_custom_call.1} parent=1 // pred_region
      _
    $region29: #{tpu_custom_call.1} parent=1 // pred_fallthru
      _
    %v27 = vld [vmem:[%s0] sm:$0xff]
    %v28 = vld [vmem:[%s0 + $0x8] sm:$0xff]
    %v29 = vld [vmem:[%s0 + $0x10] sm:$0xff]
    %v30 = vld [vmem:[%s0 + $0x18] sm:$0xff]
    %v31 = vld [vmem:[%s0 + $0x20] sm:$0xff]
    %v32 = vld [vmem:[%s0 + $0x28] sm:$0xff]
    %v33 = vld [vmem:[%s0 + $0x30] sm:$0xff]
    %v34 = vld [vmem:[%s0 + $0x38] sm:$0xff]
    %v35 = vld [vmem:[%s1] sm:$0xff]
    %v36 = vld [vmem:[%s1 + $0x8] sm:$0xff]
    %v37 = vld [vmem:[%s1 + $0x10] sm:$0xff]
    %v38 = vld [vmem:[%s1 + $0x18] sm:$0xff]
    %v39 = vld [vmem:[%s2] sm:$0x1]
    %v41 = vlaneseq
    %v42 = vshrl.u32 %v41, 7
    %v43 = vsub.s32 0, %v42
    %v44 = vrot.slane %v39, %v43
    %vm46 = vcmask 261120
    %v48 = vsel %vm46, %v27, 0
    %v51 = vsel %vm46, %v28, 0
    %v54 = vsel %vm46, %v29, 0
    %v57 = vsel %vm46, %v30, 0
    %v60 = vsel %vm46, %v31, 0
    %v63 = vsel %vm46, %v32, 0
    %v66 = vsel %vm46, %v33, 0
    %v69 = vsel %vm46, %v34, 0
    %71 = vmatprep.subr.mxu0 0.0
    %72 = vmatpush1.msra.mxu0 %v35
    %73 = vmatprep.subr.mxu0 0.0
    %74 = vmatpush1.msra.mxu0 %v36
    %75 = vmatprep.subr.mxu0 0.0
    %76 = vmatpush1.msra.mxu0 %v37
    %77 = vmatprep.subr.mxu0 0.0
    %78 = vmatpush1.msra.mxu0 %v38
    %79 = vmatprep.subr.mxu0 0.0
    %80 = vmatpush1.msra.mxu0 0.0
    %81 = vmatprep.subr.mxu0 0.0
    %82 = vmatpush1.msra.mxu0 0.0
    %83 = vmatprep.subr.mxu0 0.0
    %84 = vmatpush1.msra.mxu0 0.0
    %85 = vmatprep.subr.mxu0 0.0
    %86 = vmatpush1.msra.mxu0 0.0
    %87 = vmatprep.subr.mxu0 0.0
    %88 = vmatpush1.msra.mxu0 0.0
    %89 = vmatprep.subr.mxu0 0.0
    %90 = vmatpush1.msra.mxu0 0.0
    %91 = vmatprep.subr.mxu0 0.0
    %92 = vmatpush1.msra.mxu0 0.0
    %93 = vmatprep.subr.mxu0 0.0
    %94 = vmatpush1.msra.mxu0 0.0
    %95 = vmatprep.subr.mxu0 0.0
    %96 = vmatpush1.msra.mxu0 0.0
    %97 = vmatprep.subr.mxu0 0.0
    %98 = vmatpush1.msra.mxu0 0.0
    %99 = vmatprep.subr.mxu0 0.0
    %100 = vmatpush1.msra.mxu0 0.0
    %101 = vmatprep.subr.mxu0 0.0
    %102 = vmatpush1.msra.mxu0 0.0
    %103 = vmatprep.subr.mxu0 0.0
    %104 = vmatpush1.msra.mxu0 0.0
    %105 = vmatprep.subr.mxu0 0.0
    %106 = vmatpush1.msra.mxu0 0.0
    %107 = vmatprep.subr.mxu0 0.0
    %108 = vmatpush1.msra.mxu0 0.0
    %109 = vmatprep.subr.mxu0 0.0
    %110 = vmatpush1.msra.mxu0 0.0
    %111 = vmatprep.subr.mxu0 0.0
    %112 = vmatpush1.msra.mxu0 0.0
    %113 = vmatprep.subr.mxu0 0.0
    %114 = vmatpush1.msra.mxu0 0.0
    %115 = vmatprep.subr.mxu0 0.0
    %116 = vmatpush1.msra.mxu0 0.0
    %117 = vmatprep.subr.mxu0 0.0
    %118 = vmatpush1.msra.mxu0 0.0
    %119 = vmatprep.subr.mxu0 0.0
    %120 = vmatpush1.msra.mxu0 0.0
    %121 = vmatprep.subr.mxu0 0.0
    %122 = vmatpush1.msra.mxu0 0.0
    %123 = vmatprep.subr.mxu0 0.0
    %124 = vmatpush1.msra.mxu0 0.0
    %125 = vmatprep.subr.mxu0 0.0
    %126 = vmatpush1.msra.mxu0 0.0
    %127 = vmatprep.subr.mxu0 0.0
    %128 = vmatpush1.msra.mxu0 0.0
    %129 = vmatprep.subr.mxu0 0.0
    %130 = vmatpush1.msra.mxu0 0.0
    %131 = vmatprep.subr.mxu0 0.0
    %132 = vmatpush1.msra.mxu0 0.0
    %133 = vmatprep.subr.mxu0 0.0
    %134 = vmatpush1.msra.mxu0 0.0
    %135 = vmatprep.mubr.f32.mxu0 0.0
    %136 = vmatmul.mubr.f32.gmra.mrb[0].mxu0 %v48
    %v137 = vpop.f32.mrb[0].mxu0
    %v138 = vadd.f32 %v44, %v137
    %v139 = vpop.f32.mrb[0].mxu0
    %140 = vmatprep.mubr.f32.mxu0 0.0
    %141 = vmatmul.mubr.f32.gmra.mrb[0].mxu0 %v51
    %v142 = vpop.f32.mrb[0].mxu0
    %v143 = vadd.f32 %v44, %v142
    %v144 = vpop.f32.mrb[0].mxu0
    %145 = vmatprep.mubr.f32.mxu0 0.0
    %146 = vmatmul.mubr.f32.gmra.mrb[0].mxu0 %v54
    %v147 = vpop.f32.mrb[0].mxu0
    %v148 = vadd.f32 %v44, %v147
    %v149 = vpop.f32.mrb[0].mxu0
    %150 = vmatprep.mubr.f32.mxu0 0.0
    %151 = vmatmul.mubr.f32.gmra.mrb[0].mxu0 %v57
    %v152 = vpop.f32.mrb[0].mxu0
    %v153 = vadd.f32 %v44, %v152
    %v154 = vpop.f32.mrb[0].mxu0
    %155 = vmatprep.mubr.f32.mxu0 0.0
    %156 = vmatmul.mubr.f32.gmra.mrb[0].mxu0 %v60
    %v157 = vpop.f32.mrb[0].mxu0
    %v158 = vadd.f32 %v44, %v157
    %v159 = vpop.f32.mrb[0].mxu0
    %160 = vmatprep.mubr.f32.mxu0 0.0
    %161 = vmatmul.mubr.f32.gmra.mrb[0].mxu0 %v63
    %v162 = vpop.f32.mrb[0].mxu0
    %v163 = vadd.f32 %v44, %v162
    %v164 = vpop.f32.mrb[0].mxu0
    %165 = vmatprep.mubr.f32.mxu0 0.0
    %166 = vmatmul.mubr.f32.gmra.mrb[0].mxu0 %v66
    %v167 = vpop.f32.mrb[0].mxu0
    %v168 = vadd.f32 %v44, %v167
    %v169 = vpop.f32.mrb[0].mxu0
    %170 = vmatprep.mubr.f32.mxu0 0.0
    %171 = vmatmul.mubr.f32.gmra.mrb[0].mxu0 %v69
    %v172 = vpop.f32.mrb[0].mxu0
    %v173 = vadd.f32 %v44, %v172
    %v174 = vpop.f32.mrb[0].mxu0
    %175 = vdwg.mxu0
    %v176 = vmax.f32 %v138, 0.0
    %v177 = vmax.f32 %v143, 0.0
    %v178 = vmax.f32 %v148, 0.0
    %v179 = vmax.f32 %v153, 0.0
    %v180 = vmax.f32 %v158, 0.0
    %v181 = vmax.f32 %v163, 0.0
    %v182 = vmax.f32 %v168, 0.0
    %v183 = vmax.f32 %v173, 0.0
    %v184 = vld [vmem:[%s3] sm:$0xff]
    %v185 = vld [vmem:[%s3 + $0x8] sm:$0xff]
    %v186 = vld [vmem:[%s3 + $0x10] sm:$0xff]
    %v187 = vld [vmem:[%s3 + $0x18] sm:$0xff]
    %v188 = vld [vmem:[%s4] sm:$0x1]
    %v190 = vlaneseq
    %v191 = vshrl.u32 %v190, 7
    %v192 = vsub.s32 0, %v191
    %v193 = vrot.slane %v188, %v192
    %v196 = vsel %vm46, %v176, 0
    %v199 = vsel %vm46, %v177, 0
    %v202 = vsel %vm46, %v178, 0
    %v205 = vsel %vm46, %v179, 0
    %v208 = vsel %vm46, %v180, 0
    %v211 = vsel %vm46, %v181, 0
    %v214 = vsel %vm46, %v182, 0
    %v217 = vsel %vm46, %v183, 0
    %219 = vmatprep.subr.mxu0 0.0
    %220 = vmatpush1.msra.mxu0 %v184
    %221 = vmatprep.subr.mxu0 0.0
    %222 = vmatpush1.msra.mxu0 %v185
    %223 = vmatprep.subr.mxu0 0.0
    %224 = vmatpush1.msra.mxu0 %v186
    %225 = vmatprep.subr.mxu0 0.0
    %226 = vmatpush1.msra.mxu0 %v187
    %227 = vmatprep.subr.mxu0 0.0
    %228 = vmatpush1.msra.mxu0 0.0
    %229 = vmatprep.subr.mxu0 0.0
    %230 = vmatpush1.msra.mxu0 0.0
    %231 = vmatprep.subr.mxu0 0.0
    %232 = vmatpush1.msra.mxu0 0.0
    %233 = vmatprep.subr.mxu0 0.0
    %234 = vmatpush1.msra.mxu0 0.0
    %235 = vmatprep.subr.mxu0 0.0
    %236 = vmatpush1.msra.mxu0 0.0
    %237 = vmatprep.subr.mxu0 0.0
    %238 = vmatpush1.msra.mxu0 0.0
    %239 = vmatprep.subr.mxu0 0.0
    %240 = vmatpush1.msra.mxu0 0.0
    %241 = vmatprep.subr.mxu0 0.0
    %242 = vmatpush1.msra.mxu0 0.0
    %243 = vmatprep.subr.mxu0 0.0
    %244 = vmatpush1.msra.mxu0 0.0
    %245 = vmatprep.subr.mxu0 0.0
    %246 = vmatpush1.msra.mxu0 0.0
    %247 = vmatprep.subr.mxu0 0.0
    %248 = vmatpush1.msra.mxu0 0.0
    %249 = vmatprep.subr.mxu0 0.0
    %250 = vmatpush1.msra.mxu0 0.0
    %251 = vmatprep.subr.mxu0 0.0
    %252 = vmatpush1.msra.mxu0 0.0
    %253 = vmatprep.subr.mxu0 0.0
    %254 = vmatpush1.msra.mxu0 0.0
    %255 = vmatprep.subr.mxu0 0.0
    %256 = vmatpush1.msra.mxu0 0.0
    %257 = vmatprep.subr.mxu0 0.0
    %258 = vmatpush1.msra.mxu0 0.0
    %259 = vmatprep.subr.mxu0 0.0
    %260 = vmatpush1.msra.mxu0 0.0
    %261 = vmatprep.subr.mxu0 0.0
    %262 = vmatpush1.msra.mxu0 0.0
    %263 = vmatprep.subr.mxu0 0.0
    %264 = vmatpush1.msra.mxu0 0.0
    %265 = vmatprep.subr.mxu0 0.0
    %266 = vmatpush1.msra.mxu0 0.0
    %267 = vmatprep.subr.mxu0 0.0
    %268 = vmatpush1.msra.mxu0 0.0
    %269 = vmatprep.subr.mxu0 0.0
    %270 = vmatpush1.msra.mxu0 0.0
    %271 = vmatprep.subr.mxu0 0.0
    %272 = vmatpush1.msra.mxu0 0.0
    %273 = vmatprep.subr.mxu0 0.0
    %274 = vmatpush1.msra.mxu0 0.0
    %275 = vmatprep.subr.mxu0 0.0
    %276 = vmatpush1.msra.mxu0 0.0
    %277 = vmatprep.subr.mxu0 0.0
    %278 = vmatpush1.msra.mxu0 0.0
    %279 = vmatprep.subr.mxu0 0.0
    %280 = vmatpush1.msra.mxu0 0.0
    %281 = vmatprep.subr.mxu0 0.0
    %282 = vmatpush1.msra.mxu0 0.0
    %283 = vmatprep.mubr.f32.mxu0 0.0
    %284 = vmatmul.mubr.f32.gmra.mrb[0].mxu0 %v196
    %v285 = vpop.f32.mrb[0].mxu0
    %v286 = vadd.f32 %v193, %v285
    %v287 = vpop.f32.mrb[0].mxu0
    %288 = vmatprep.mubr.f32.mxu0 0.0
    %289 = vmatmul.mubr.f32.gmra.mrb[0].mxu0 %v199
    %v290 = vpop.f32.mrb[0].mxu0
    %v291 = vadd.f32 %v193, %v290
    %v292 = vpop.f32.mrb[0].mxu0
    %293 = vmatprep.mubr.f32.mxu0 0.0
    %294 = vmatmul.mubr.f32.gmra.mrb[0].mxu0 %v202
    %v295 = vpop.f32.mrb[0].mxu0
    %v296 = vadd.f32 %v193, %v295
    %v297 = vpop.f32.mrb[0].mxu0
    %298 = vmatprep.mubr.f32.mxu0 0.0
    %299 = vmatmul.mubr.f32.gmra.mrb[0].mxu0 %v205
    %v300 = vpop.f32.mrb[0].mxu0
    %v301 = vadd.f32 %v193, %v300
    %v302 = vpop.f32.mrb[0].mxu0
    %303 = vmatprep.mubr.f32.mxu0 0.0
    %304 = vmatmul.mubr.f32.gmra.mrb[0].mxu0 %v208
    %v305 = vpop.f32.mrb[0].mxu0
    %v306 = vadd.f32 %v193, %v305
    %v307 = vpop.f32.mrb[0].mxu0
    %308 = vmatprep.mubr.f32.mxu0 0.0
    %309 = vmatmul.mubr.f32.gmra.mrb[0].mxu0 %v211
    %v310 = vpop.f32.mrb[0].mxu0
    %v311 = vadd.f32 %v193, %v310
    %v312 = vpop.f32.mrb[0].mxu0
    %313 = vmatprep.mubr.f32.mxu0 0.0
    %314 = vmatmul.mubr.f32.gmra.mrb[0].mxu0 %v214
    %v315 = vpop.f32.mrb[0].mxu0
    %v316 = vadd.f32 %v193, %v315
    %v317 = vpop.f32.mrb[0].mxu0
    %318 = vmatprep.mubr.f32.mxu0 0.0
    %319 = vmatmul.mubr.f32.gmra.mrb[0].mxu0 %v217
    %v320 = vpop.f32.mrb[0].mxu0
    %v321 = vadd.f32 %v193, %v320
    %v322 = vpop.f32.mrb[0].mxu0
    %323 = vdwg.mxu0
    %324 = vmax.xlane.f32.xlu0 %v286
    %v325 = vpop.xlane.xlu0 %324
    %326 = vmax.xlane.f32.xlu0 %v291
    %v327 = vpop.xlane.xlu0 %326
    %328 = vmax.xlane.f32.xlu0 %v296
    %v329 = vpop.xlane.xlu0 %328
    %330 = vmax.xlane.f32.xlu0 %v301
    %v331 = vpop.xlane.xlu0 %330
    %332 = vmax.xlane.f32.xlu0 %v306
    %v333 = vpop.xlane.xlu0 %332
    %334 = vmax.xlane.f32.xlu0 %v311
    %v335 = vpop.xlane.xlu0 %334
    %336 = vmax.xlane.f32.xlu0 %v316
    %v337 = vpop.xlane.xlu0 %336
    %338 = vmax.xlane.f32.xlu0 %v321
    %v339 = vpop.xlane.xlu0 %338
    %v340 = vsub.f32 %v286, %v325
    %v341 = vsub.f32 %v291, %v327
    %v342 = vsub.f32 %v296, %v329
    %v343 = vsub.f32 %v301, %v331
    %v344 = vsub.f32 %v306, %v333
    %v345 = vsub.f32 %v311, %v335
    %v346 = vsub.f32 %v316, %v337
    %v347 = vsub.f32 %v321, %v339
    %v348 = vmul.f32 %v340, 1.442695
    %v349 = vpow.pop %v348
    %v350 = vmul.f32 %v341, 1.442695
    %v351 = vpow.pop %v350
    %v352 = vmul.f32 %v342, 1.442695
    %v353 = vpow.pop %v352
    %v354 = vmul.f32 %v343, 1.442695
    %v355 = vpow.pop %v354
    %v356 = vmul.f32 %v344, 1.442695
    %v357 = vpow.pop %v356
    %v358 = vmul.f32 %v345, 1.442695
    %v359 = vpow.pop %v358
    %v360 = vmul.f32 %v346, 1.442695
    %v361 = vpow.pop %v360
    %v362 = vmul.f32 %v347, 1.442695
    %v363 = vpow.pop %v362
    %364 = vadd.xlane.f32.xlu0 %v349
    %v365 = vpop.xlane.xlu0 %364
    %366 = vadd.xlane.f32.xlu0 %v351
    %v367 = vpop.xlane.xlu0 %366
    %368 = vadd.xlane.f32.xlu0 %v353
    %v369 = vpop.xlane.xlu0 %368
    %370 = vadd.xlane.f32.xlu0 %v355
    %v371 = vpop.xlane.xlu0 %370
    %372 = vadd.xlane.f32.xlu0 %v357
    %v373 = vpop.xlane.xlu0 %372
    %374 = vadd.xlane.f32.xlu0 %v359
    %v375 = vpop.xlane.xlu0 %374
    %376 = vadd.xlane.f32.xlu0 %v361
    %v377 = vpop.xlane.xlu0 %376
    %378 = vadd.xlane.f32.xlu0 %v363
    %v379 = vpop.xlane.xlu0 %378
    %v380 = vrcp.pop %v365
    %v381 = vmul.f32 %v349, %v380
    %v382 = vrcp.pop %v367
    %v383 = vmul.f32 %v351, %v382
    %v384 = vrcp.pop %v369
    %v385 = vmul.f32 %v353, %v384
    %v386 = vrcp.pop %v371
    %v387 = vmul.f32 %v355, %v386
    %v388 = vrcp.pop %v373
    %v389 = vmul.f32 %v357, %v388
    %v390 = vrcp.pop %v375
    %v391 = vmul.f32 %v359, %v390
    %v392 = vrcp.pop %v377
    %v393 = vmul.f32 %v361, %v392
    %v394 = vrcp.pop %v379
    %v395 = vmul.f32 %v363, %v394
    %v396 = vld [vmem:[%s5] sm:$0xff]
    %v397 = vld [vmem:[%s5 + $0x8] sm:$0xff]
    %v398 = vld [vmem:[%s5 + $0x10] sm:$0xff]
    %v399 = vld [vmem:[%s5 + $0x18] sm:$0xff]
    %v400 = vld [vmem:[%s5 + $0x20] sm:$0xff]
    %v401 = vld [vmem:[%s5 + $0x28] sm:$0xff]
    %v402 = vld [vmem:[%s5 + $0x30] sm:$0xff]
    %v403 = vld [vmem:[%s5 + $0x38] sm:$0xff]
    %v404 = vmul.f32 %v381, %v396
    %v405 = vmul.f32 %v383, %v397
    %v406 = vmul.f32 %v385, %v398
    %v407 = vmul.f32 %v387, %v399
    %v408 = vmul.f32 %v389, %v400
    %v409 = vmul.f32 %v391, %v401
    %v410 = vmul.f32 %v393, %v402
    %v411 = vmul.f32 %v395, %v403
    %v412 = vld [vmem:[%s6] sm:$0x3]
    %vm413 = vcmask 15360
    %v415 = vsel %vm413, %v404, 0
    %v418 = vsel %vm413, %v405, 0
    %v421 = vsel %vm413, %v406, 0
    %v424 = vsel %vm413, %v407, 0
    %v427 = vsel %vm413, %v408, 0
    %v430 = vsel %vm413, %v409, 0
    %v433 = vsel %vm413, %v410, 0
    %v436 = vsel %vm413, %v411, 0
    %vm438 = vcmask 1041408
    %v440 = vsel %vm438, %v412, 0
    %442 = vmatprep.subr.mxu0 0.0
    %443 = vmatpush1.msra.mxu0 %v440
    %444 = vmatprep.subr.mxu0 0.0
    %445 = vmatpush1.msra.mxu0 0.0
    %446 = vmatprep.subr.mxu0 0.0
    %447 = vmatpush1.msra.mxu0 0.0
    %448 = vmatprep.subr.mxu0 0.0
    %449 = vmatpush1.msra.mxu0 0.0
    %450 = vmatprep.subr.mxu0 0.0
    %451 = vmatpush1.msra.mxu0 0.0
    %452 = vmatprep.subr.mxu0 0.0
    %453 = vmatpush1.msra.mxu0 0.0
    %454 = vmatprep.subr.mxu0 0.0
    %455 = vmatpush1.msra.mxu0 0.0
    %456 = vmatprep.subr.mxu0 0.0
    %457 = vmatpush1.msra.mxu0 0.0
    %458 = vmatprep.subr.mxu0 0.0
    %459 = vmatpush1.msra.mxu0 0.0
    %460 = vmatprep.subr.mxu0 0.0
    %461 = vmatpush1.msra.mxu0 0.0
    %462 = vmatprep.subr.mxu0 0.0
    %463 = vmatpush1.msra.mxu0 0.0
    %464 = vmatprep.subr.mxu0 0.0
    %465 = vmatpush1.msra.mxu0 0.0
    %466 = vmatprep.subr.mxu0 0.0
    %467 = vmatpush1.msra.mxu0 0.0
    %468 = vmatprep.subr.mxu0 0.0
    %469 = vmatpush1.msra.mxu0 0.0
    %470 = vmatprep.subr.mxu0 0.0
    %471 = vmatpush1.msra.mxu0 0.0
    %472 = vmatprep.subr.mxu0 0.0
    %473 = vmatpush1.msra.mxu0 0.0
    %474 = vmatprep.subr.mxu0 0.0
    %475 = vmatpush1.msra.mxu0 0.0
    %476 = vmatprep.subr.mxu0 0.0
    %477 = vmatpush1.msra.mxu0 0.0
    %478 = vmatprep.subr.mxu0 0.0
    %479 = vmatpush1.msra.mxu0 0.0
    %480 = vmatprep.subr.mxu0 0.0
    %481 = vmatpush1.msra.mxu0 0.0
    %482 = vmatprep.subr.mxu0 0.0
    %483 = vmatpush1.msra.mxu0 0.0
    %484 = vmatprep.subr.mxu0 0.0
    %485 = vmatpush1.msra.mxu0 0.0
    %486 = vmatprep.subr.mxu0 0.0
    %487 = vmatpush1.msra.mxu0 0.0
    %488 = vmatprep.subr.mxu0 0.0
    %489 = vmatpush1.msra.mxu0 0.0
    %490 = vmatprep.subr.mxu0 0.0
    %491 = vmatpush1.msra.mxu0 0.0
    %492 = vmatprep.subr.mxu0 0.0
    %493 = vmatpush1.msra.mxu0 0.0
    %494 = vmatprep.subr.mxu0 0.0
    %495 = vmatpush1.msra.mxu0 0.0
    %496 = vmatprep.subr.mxu0 0.0
    %497 = vmatpush1.msra.mxu0 0.0
    %498 = vmatprep.subr.mxu0 0.0
    %499 = vmatpush1.msra.mxu0 0.0
    %500 = vmatprep.subr.mxu0 0.0
    %501 = vmatpush1.msra.mxu0 0.0
    %502 = vmatprep.subr.mxu0 0.0
    %503 = vmatpush1.msra.mxu0 0.0
    %504 = vmatprep.subr.mxu0 0.0
    %505 = vmatpush1.msra.mxu0 0.0
    %506 = vmatprep.mubr.f32.mxu0 0.0
    %507 = vmatmul.mubr.f32.gmra.mrb[0].mxu0 %v415
    %v508 = vpop.f32.mrb[0].mxu0
    %v509 = vadd.f32 0.0, %v508
    %v510 = vpop.f32.mrb[0].mxu0
    %511 = vmatprep.mubr.f32.mxu0 0.0
    %512 = vmatmul.mubr.f32.gmra.mrb[0].mxu0 %v418
    %v513 = vpop.f32.mrb[0].mxu0
    %v514 = vadd.f32 0.0, %v513
    %v515 = vpop.f32.mrb[0].mxu0
    %516 = vmatprep.mubr.f32.mxu0 0.0
    %517 = vmatmul.mubr.f32.gmra.mrb[0].mxu0 %v421
    %v518 = vpop.f32.mrb[0].mxu0
    %v519 = vadd.f32 0.0, %v518
    %v520 = vpop.f32.mrb[0].mxu0
    %521 = vmatprep.mubr.f32.mxu0 0.0
    %522 = vmatmul.mubr.f32.gmra.mrb[0].mxu0 %v424
    %v523 = vpop.f32.mrb[0].mxu0
    %v524 = vadd.f32 0.0, %v523
    %v525 = vpop.f32.mrb[0].mxu0
    %526 = vmatprep.mubr.f32.mxu0 0.0
    %527 = vmatmul.mubr.f32.gmra.mrb[0].mxu0 %v427
    %v528 = vpop.f32.mrb[0].mxu0
    %v529 = vadd.f32 0.0, %v528
    %v530 = vpop.f32.mrb[0].mxu0
    %531 = vmatprep.mubr.f32.mxu0 0.0
    %532 = vmatmul.mubr.f32.gmra.mrb[0].mxu0 %v430
    %v533 = vpop.f32.mrb[0].mxu0
    %v534 = vadd.f32 0.0, %v533
    %v535 = vpop.f32.mrb[0].mxu0
    %536 = vmatprep.mubr.f32.mxu0 0.0
    %537 = vmatmul.mubr.f32.gmra.mrb[0].mxu0 %v433
    %v538 = vpop.f32.mrb[0].mxu0
    %v539 = vadd.f32 0.0, %v538
    %v540 = vpop.f32.mrb[0].mxu0
    %541 = vmatprep.mubr.f32.mxu0 0.0
    %542 = vmatmul.mubr.f32.gmra.mrb[0].mxu0 %v436
    %v543 = vpop.f32.mrb[0].mxu0
    %v544 = vadd.f32 0.0, %v543
    %v545 = vpop.f32.mrb[0].mxu0
    %546 = vdwg.mxu0
    %v547 = vsub.f32 %v286, %v509
    %v548 = vsub.f32 %v291, %v514
    %v549 = vsub.f32 %v296, %v519
    %v550 = vsub.f32 %v301, %v524
    %v551 = vsub.f32 %v306, %v529
    %v552 = vsub.f32 %v311, %v534
    %v553 = vsub.f32 %v316, %v539
    %v554 = vsub.f32 %v321, %v544
    %555 = vst [vmem:[#allocation2] sm:$0xff] %v547
    %556 = vst [vmem:[#allocation2 + $0x8] sm:$0xff] %v548
    %557 = vst [vmem:[#allocation2 + $0x10] sm:$0xff] %v549
    %558 = vst [vmem:[#allocation2 + $0x18] sm:$0xff] %v550
    %559 = vst [vmem:[#allocation2 + $0x20] sm:$0xff] %v551
    %560 = vst [vmem:[#allocation2 + $0x28] sm:$0xff] %v552
    %561 = vst [vmem:[#allocation2 + $0x30] sm:$0xff] %v553
    %562 = vst [vmem:[#allocation2 + $0x38] sm:$0xff] %v554
    // Predicated region
    $region30: #{tpu_custom_call.1} parent=1 // pred_check
      _
    $region31: #{tpu_custom_call.1} parent=1 // pred_check_branch
      %564 = sbr.rel (0) target = $region33
    $region32: #{tpu_custom_call.1} parent=1 // pred_region
      %s566 = ssub.s32 1024, 1024
      %567 = vsyncadd [#allocation3], %s566
      %s568 = sshll.u32 [#allocation2], 4
      %s569 = int_to_ptr.vmem [resolvable:$true] %s568
      %574 = dma.vmem_to_hbm [thread:$0]  %s569, 1024, %s7, [#allocation3], 128, 128, 8
    $region33: #{tpu_custom_call.1} parent=1 // pred_fallthru
      _
    // Predicated region
    $region34: #{tpu_custom_call.1} parent=1 // pred_check
      _
    $region35: #{tpu_custom_call.1} parent=1 // pred_check_branch
      %576 = sbr.rel (0) target = $region37
    $region36: #{tpu_custom_call.1} parent=1 // pred_region
      %577 = dma.done [#allocation3], 1024
    $region37: #{tpu_custom_call.1} parent=1 // pred_fallthru
      _
    %578 = vsyncpa [#allocation3], 1

</llo_original>
